<compile_context>
chip_gen: v7x
topology: tpu7x:2x2x1
jax: 0.10.0
libtpu: 0.0.40
codegen_flags: <defaults>
</compile_context>

<pallas_src>
import math

import jax
import jax.numpy as jnp
from jax.experimental import pallas as pl
from jax.experimental.pallas import tpu as pltpu

LN_EPS = 1e-5                      # torch.nn.LayerNorm default
_INV_SQRT2 = 1.0 / math.sqrt(2.0)  # exact (erf-based) GELU constant


def _pick_tile(dim, candidates):
    """Largest candidate tile that divides `dim` (None if nothing divides)."""
    for c in candidates:
        if c <= dim and dim % c == 0:
            return c
    return None


# ----------------------------------------------------------------------------
# Kernel 1: fused mlp1  (LayerNorm -> Linear -> GELU -> Linear)
#   grid = (M tiles, K tiles over the intermediate llm_hidden dim)
#   per (i, k):  xn = LN(x_i)            (full feature row, f32 stats)
#                h_k = GELU(xn @ W1[:, k-slice] + b1[k-slice])   (bf16 x bf16)
#                acc += h_k @ W2[k-slice, :]                      (f32 acc)
#   at last k:   out = (acc + b2).astype(bf16)
# ----------------------------------------------------------------------------
def mlp1_kernel(x_ref, g_ref, b_ref, w1_ref, b1_ref, w2_ref, b2_ref,
                o_ref, acc_ref):
    k = pl.program_id(1)

    @pl.when(k == 0)
    def _init():
        acc_ref[...] = jnp.zeros_like(acc_ref)

    # LayerNorm over the full feature axis in f32 (x block carries full c_in
    # and is resident across the K grid axis, so the stats are exact).
    x = x_ref[...].astype(jnp.float32)
    mu = jnp.mean(x, axis=-1, keepdims=True)
    var = jnp.mean(jnp.square(x - mu), axis=-1, keepdims=True)
    xn = (x - mu) * jax.lax.rsqrt(var + LN_EPS)
    xn = xn * g_ref[...] + b_ref[...]

    # Matmul 1 K-slice: bf16 operands on the MXU, f32 accumulation.
    h = jnp.dot(xn.astype(jnp.bfloat16), w1_ref[...],
                preferred_element_type=jnp.float32) + b1_ref[...]
    # exact GELU (matches torch.nn.GELU() default, erf based)
    h = 0.5 * h * (1.0 + jax.lax.erf(h * _INV_SQRT2))

    # Matmul 2 partial product accumulated in the f32 VMEM scratch.
    acc_ref[...] += jnp.dot(h.astype(jnp.bfloat16), w2_ref[...],
                            preferred_element_type=jnp.float32)

    @pl.when(k == pl.num_programs(1) - 1)
    def _finalize():
        o_ref[...] = (acc_ref[...] + b2_ref[...]).astype(o_ref.dtype)


def mlp1_pallas(x, gamma, beta, w1t, b1, w2t, b2, *,
                tm_max=256, tk_max=512, out_dtype=jnp.bfloat16):
    """x: (M, c_in) f32/bf16; w1t: (c_in, d) bf16; w2t: (d, d_out) bf16."""
    m, c_in = x.shape
    d_mid = w1t.shape[1]
    d_out = w2t.shape[1]

    # Row tile: as large as possible (MXU-friendly), multiple of 8.
    tm = _pick_tile(m, (tm_max, 128, 64, 32, 16, 8))
    if tm is None:
        pad = (-m) % 8
        x = jnp.pad(x, ((0, pad), (0, 0)))
        tm = _pick_tile(m + pad, (tm_max, 128, 64, 32, 16, 8))
    m_pad = x.shape[0]

    # K tile over the intermediate llm_hidden dim (multiple of 128).
    tk = _pick_tile(d_mid, (tk_max, 256, 128)) or d_mid

    grid = (m_pad // tm, d_mid // tk)

    out = pl.pallas_call(
        mlp1_kernel,
        out_shape=jax.ShapeDtypeStruct((m_pad, d_out), out_dtype),
        grid_spec=pltpu.PrefetchScalarGridSpec(
            num_scalar_prefetch=0,
            grid=grid,
            in_specs=[
                pl.BlockSpec((tm, c_in), lambda i, k: (i, 0)),    # x rows (resident over k)
                pl.BlockSpec((1, c_in), lambda i, k: (0, 0)),     # LN gamma
                pl.BlockSpec((1, c_in), lambda i, k: (0, 0)),     # LN beta
                pl.BlockSpec((c_in, tk), lambda i, k: (0, k)),    # W1^T K-slice (bf16)
                pl.BlockSpec((1, tk), lambda i, k: (0, k)),       # b1  K-slice
                pl.BlockSpec((tk, d_out), lambda i, k: (k, 0)),   # W2^T K-slice (bf16)
                pl.BlockSpec((1, d_out), lambda i, k: (0, 0)),    # b2
            ],
            out_specs=pl.BlockSpec((tm, d_out), lambda i, k: (i, 0)),
            scratch_shapes=[pltpu.VMEM((tm, d_out), jnp.float32)],
        ),
        compiler_params=pltpu.CompilerParams(
            dimension_semantics=("parallel", "arbitrary"),
            vmem_limit_bytes=64 * 1024 * 1024),
    )(x, gamma, beta, w1t, b1, w2t, b2)
    return out[:m]


# ----------------------------------------------------------------------------
# Kernel 2: merge_vision_embeddings
#   merged[s] = vit_flat[gather_idx[s]] if input_ids[s] == IMG_CONTEXT
#               else text_embeds[s]
#   - sequence tiled ("parallel"); text tile streamed, full vit table resident
#     in VMEM; ids / gather indices / image-token-id read from SMEM (scalar
#     prefetch); rows gathered in-kernel (no pre-gathered (S, D) HBM array).
# ----------------------------------------------------------------------------
def merge_kernel(ids_ref, gidx_ref, imgid_ref, text_ref, vit_ref, o_ref):
    i = pl.program_id(0)
    ts = o_ref.shape[0]
    img_id = imgid_ref[0]

    def body(r, carry):
        s = i * ts + r
        w = (ids_ref[s] == img_id).astype(jnp.float32)          # scalar 0/1
        g = gidx_ref[s]
        v_row = vit_ref[pl.ds(g, 1), :].astype(jnp.float32)
        t_row = text_ref[pl.ds(r, 1), :].astype(jnp.float32)
        o_ref[pl.ds(r, 1), :] = (w * v_row + (1.0 - w) * t_row).astype(o_ref.dtype)
        return carry

    jax.lax.fori_loop(0, ts, body, 0)


def merge_pallas(input_ids, gather_idx, img_token_id, text_embeds, vit_flat,
                 *, ts_max=256):
    s, d = text_embeds.shape
    n_vit = vit_flat.shape[0]

    ts = _pick_tile(s, (ts_max, 256, 128, 64, 32, 16, 8))
    if ts is None:
        pad = (-s) % 8
        input_ids = jnp.pad(input_ids, (0, pad), constant_values=-1)
        gather_idx = jnp.pad(gather_idx, (0, pad))
        text_embeds = jnp.pad(text_embeds, ((0, pad), (0, 0)))
        ts = _pick_tile(s + pad, (ts_max, 256, 128, 64, 32, 16, 8))
    s_pad = text_embeds.shape[0]

    imgid = jnp.reshape(jnp.asarray(img_token_id, jnp.int32), (1,))

    # TODO(synk): could additionally alias the output onto text_embeds with
    # input_output_aliases to drop the extra HBM allocation for text rows.
    out = pl.pallas_call(
        merge_kernel,
        out_shape=jax.ShapeDtypeStruct((s_pad, d), text_embeds.dtype),
        grid_spec=pltpu.PrefetchScalarGridSpec(
            num_scalar_prefetch=3,                      # ids, gather_idx, img_id
            grid=(s_pad // ts,),
            in_specs=[
                pl.BlockSpec((ts, d), lambda i, ids, gi, im: (i, 0)),     # text tile
                pl.BlockSpec((n_vit, d), lambda i, ids, gi, im: (0, 0)),  # vit table (resident)
            ],
            out_specs=pl.BlockSpec((ts, d), lambda i, ids, gi, im: (i, 0)),
        ),
        compiler_params=pltpu.CompilerParams(
            dimension_semantics=("parallel",)),
    )(input_ids.astype(jnp.int32), gather_idx.astype(jnp.int32), imgid,
      text_embeds, vit_flat)
    return out[:s]


# ----------------------------------------------------------------------------
# Glue: pixel_shuffle (exactly the PyTorch view/permute sequence, ps_version v2)
# ----------------------------------------------------------------------------
def pixel_shuffle(x, scale_factor=0.5, ps_version="v2"):
    n, w, h, c = x.shape
    x = x.reshape(n, w, int(h * scale_factor), int(c / scale_factor))
    x = jnp.transpose(x, (0, 2, 1, 3))
    x = x.reshape(n, int(h * scale_factor), int(w * scale_factor),
                  int(c / (scale_factor * scale_factor)))
    if ps_version != "v1":
        x = jnp.transpose(x, (0, 2, 1, 3))
    return x


# ----------------------------------------------------------------------------
# Pure-JAX reference (mirrors the kernel's bf16-matmul / f32-accumulate path)
# ----------------------------------------------------------------------------
def reference(vit_embeds, gamma, beta, w1t, b1, w2t, b2,
              input_ids, embed_table, img_token_id, downsample_ratio):
    x = vit_embeds[:, 1:, :]                               # drop CLS
    hw = int(x.shape[1] ** 0.5)
    x = x.reshape(x.shape[0], hw, hw, -1)
    x = pixel_shuffle(x, scale_factor=downsample_ratio)
    x = x.reshape(x.shape[0], -1, x.shape[-1])
    # mlp1 (LN in f32, bf16 matmul operands, f32 accumulation, bf16 output)
    mu = jnp.mean(x, axis=-1, keepdims=True)
    var = jnp.mean(jnp.square(x - mu), axis=-1, keepdims=True)
    xn = (x - mu) / jnp.sqrt(var + LN_EPS) * gamma[0] + beta[0]
    h = jnp.dot(xn.astype(jnp.bfloat16), w1t,
                preferred_element_type=jnp.float32) + b1[0]
    h = 0.5 * h * (1.0 + jax.lax.erf(h * _INV_SQRT2))
    y = jnp.dot(h.astype(jnp.bfloat16), w2t,
                preferred_element_type=jnp.float32) + b2[0]
    y = y.astype(jnp.bfloat16)                             # (B, T, D)
    vit_flat = y.reshape(-1, y.shape[-1])
    # merge
    text = embed_table[input_ids].astype(jnp.bfloat16)
    mask = input_ids == img_token_id
    idx = jnp.clip(jnp.cumsum(mask.astype(jnp.int32)) - 1, 0,
                   vit_flat.shape[0] - 1)
    merged = jnp.where(mask[:, None], vit_flat[idx], text)
    return y, merged


if __name__ == "__main__":
    key = jax.random.PRNGKey(0)
    ks = jax.random.split(key, 10)

    # ---- small synthetic "config" ----
    vit_hidden = 32
    downsample_ratio = 0.5
    hw = 4                                   # vit patch grid -> 16 patches + CLS
    num_blocks = 2                           # image tiles (batch of the ViT)
    num_image_token = int(hw * hw * downsample_ratio ** 2)   # 4 per block
    in_dim = vit_hidden * int(1 / downsample_ratio) ** 2     # 128
    llm_hidden = 128
    vocab = 32
    seq_len = 32
    img_context_token_id = vocab - 1

    # ---- synthetic ViT output (stand-in for InternVisionModel) ----
    vit_embeds = jax.random.normal(ks[0], (num_blocks, 1 + hw * hw, vit_hidden),
                                   dtype=jnp.float32)

    # ---- mlp1 parameters (torch layout: W is (out, in); we pass bf16 W^T) ----
    gamma = jax.random.normal(ks[1], (1, in_dim), jnp.float32) * 0.1 + 1.0
    beta = jax.random.normal(ks[2], (1, in_dim), jnp.float32) * 0.1
    w1 = jax.random.normal(ks[3], (llm_hidden, in_dim), jnp.float32) / math.sqrt(in_dim)
    b1 = jax.random.normal(ks[4], (1, llm_hidden), jnp.float32) * 0.02
    w2 = jax.random.normal(ks[5], (llm_hidden, llm_hidden), jnp.float32) / math.sqrt(llm_hidden)
    b2 = jax.random.normal(ks[6], (1, llm_hidden), jnp.float32) * 0.02
    w1t = w1.T.astype(jnp.bfloat16)           # (in, out), bf16 for the MXU
    w2t = w2.T.astype(jnp.bfloat16)

    # ---- language-model embedding table and prompt ids ----
    embed_table = jax.random.normal(ks[7], (vocab, llm_hidden), jnp.float32)
    n_img_tok = num_blocks * num_image_token                  # 8 image positions
    txt_ids = jax.random.randint(ks[8], (seq_len,), 0, vocab - 1)
    pos = jnp.arange(seq_len)
    input_ids = jnp.where((pos >= 4) & (pos < 4 + n_img_tok),
                          img_context_token_id, txt_ids).astype(jnp.int32)

    # ================= forward (this module's compute) =================
    # extract_feature: drop CLS, pixel_shuffle (glue), fused mlp1 (Pallas)
    x = vit_embeds[:, 1:, :].reshape(num_blocks, hw, hw, vit_hidden)
    x = pixel_shuffle(x, scale_factor=downsample_ratio)       # (B, 2, 2, 128)
    x = x.reshape(num_blocks, -1, x.shape[-1])                # (B, 4, 128)
    x2d = x.reshape(-1, in_dim)                               # (8, 128)
    vit_proj = mlp1_pallas(x2d, gamma, beta, w1t, b1, w2t, b2)   # (8, 128) bf16
    vit_embeds_out = vit_proj.reshape(num_blocks, num_image_token, llm_hidden)

    # merge_vision_embeddings: embedding lookup + cumsum index (glue),
    # sequence-tiled select with in-kernel ViT row gather (Pallas)
    text_embeds = embed_table[input_ids].astype(jnp.bfloat16)   # (S, D)
    mask = input_ids == img_context_token_id
    gather_idx = jnp.clip(jnp.cumsum(mask.astype(jnp.int32)) - 1,
                          0, vit_proj.shape[0] - 1)
    # ts_max=8 keeps multiple grid steps at this toy seq_len (default is 256)
    inputs_embeds = merge_pallas(input_ids, gather_idx, img_context_token_id,
                                 text_embeds, vit_proj, ts_max=8)
    jax.block_until_ready(inputs_embeds)

    # TODO(synk): language_model.model(...) decoder stack not implemented;
    # `inputs_embeds` is what this module hands to it.

    # ================= verification vs pure-JAX reference ==============
    ref_vit, ref_merged = reference(vit_embeds, gamma, beta, w1t, b1, w2t, b2,
                                    input_ids, embed_table,
                                    img_context_token_id, downsample_ratio)
    assert jnp.allclose(vit_embeds_out.astype(jnp.float32),
                        ref_vit.astype(jnp.float32),
                        atol=3e-2, rtol=3e-2), "mlp1 kernel mismatch"
    assert jnp.allclose(inputs_embeds.astype(jnp.float32),
                        ref_merged.astype(jnp.float32),
                        atol=3e-2, rtol=3e-2), "merge kernel mismatch"

    print("KERNEL_OK")
</pallas_src>

<mosaic_0001>
module attributes {stable_mosaic.version = 11 : i64} {
  func.func @mlp1_kernel(%arg0: i32, %arg1: i32, %arg2: memref<8x128xf32, #tpu.memory_space<vmem>>, %arg3: memref<1x128xf32, #tpu.memory_space<vmem>>, %arg4: memref<1x128xf32, #tpu.memory_space<vmem>>, %arg5: memref<128x128xbf16, #tpu.memory_space<vmem>>, %arg6: memref<1x128xf32, #tpu.memory_space<vmem>>, %arg7: memref<128x128xbf16, #tpu.memory_space<vmem>>, %arg8: memref<1x128xf32, #tpu.memory_space<vmem>>, %arg9: memref<8x128xbf16, #tpu.memory_space<vmem>>, %arg10: memref<8x128xf32, #tpu.memory_space<vmem>>) attributes {dimension_semantics = [#tpu.dimension_semantics<parallel>, #tpu.dimension_semantics<arbitrary>], iteration_bounds = array<i64: 1, 1>, scalar_prefetch = 0 : i64, scratch_operands = 1 : i64, tpu.core_type = #tpu.core_type<tc>, window_params = [{transform_indices = @transform_0, window_bounds = array<i64: 8, 128>}, {pipeline_mode = #tpu.pipeline_mode<synchronous>, transform_indices = @transform_1, window_bounds = array<i64: 1, 128>}, {pipeline_mode = #tpu.pipeline_mode<synchronous>, transform_indices = @transform_2, window_bounds = array<i64: 1, 128>}, {transform_indices = @transform_3, window_bounds = array<i64: 128, 128>}, {transform_indices = @transform_4, window_bounds = array<i64: 1, 128>}, {transform_indices = @transform_5, window_bounds = array<i64: 128, 128>}, {pipeline_mode = #tpu.pipeline_mode<synchronous>, transform_indices = @transform_6, window_bounds = array<i64: 1, 128>}, {transform_indices = @transform_7, window_bounds = array<i64: 8, 128>}]} {
    %c0_i32 = arith.constant 0 : i32
    %0 = arith.cmpi eq, %arg1, %c0_i32 : i32
    %1 = arith.extui %0 : i1 to i32
    %c0_i32_0 = arith.constant 0 : i32
    %2 = arith.cmpi ne, %1, %c0_i32_0 : i32
    scf.if %2 {
      %cst_27 = arith.constant 0.000000e+00 : f32
      %51 = vector.broadcast %cst_27 : f32 to vector<8x128xf32>
      %c0_28 = arith.constant 0 : index
      %c0_29 = arith.constant 0 : index
      %52 = vector.load %arg10[%c0_28, %c0_29] : memref<8x128xf32, #tpu.memory_space<vmem>>, vector<8x128xf32>
      tpu.vector_store %arg10[%c0_28, %c0_29], %51 {strides = array<i32>} : memref<8x128xf32, #tpu.memory_space<vmem>>, vector<8x128xf32>,
    } else {
    }
    %c0 = arith.constant 0 : index
    %c0_1 = arith.constant 0 : index
    %3 = vector.load %arg2[%c0, %c0_1] : memref<8x128xf32, #tpu.memory_space<vmem>>, vector<8x128xf32>
    %cst = arith.constant dense<0.000000e+00> : vector<8xf32>
    %4 = vector.multi_reduction <add>, %3, %cst [1] : vector<8x128xf32> to vector<8xf32>
    %5 = vector.shape_cast %4 : vector<8xf32> to vector<8x1xf32>
    %cst_2 = arith.constant 1.280000e+02 : f32
    %6 = vector.broadcast %cst_2 : f32 to vector<8x1xf32>
    %7 = arith.divf %5, %6 : vector<8x1xf32>
    %8 = vector.broadcast %7 : vector<8x1xf32> to vector<8x128xf32>
    %9 = arith.subf %3, %8 : vector<8x128xf32>
    %10 = arith.mulf %9, %9 : vector<8x128xf32>
    %cst_3 = arith.constant dense<0.000000e+00> : vector<8xf32>
    %11 = vector.multi_reduction <add>, %10, %cst_3 [1] : vector<8x128xf32> to vector<8xf32>
    %12 = vector.shape_cast %11 : vector<8xf32> to vector<8x1xf32>
    %cst_4 = arith.constant 1.280000e+02 : f32
    %13 = vector.broadcast %cst_4 : f32 to vector<8x1xf32>
    %14 = arith.divf %12, %13 : vector<8x1xf32>
    %15 = vector.broadcast %7 : vector<8x1xf32> to vector<8x128xf32>
    %16 = arith.subf %3, %15 : vector<8x128xf32>
    %cst_5 = arith.constant 9.99999974E-6 : f32
    %17 = vector.broadcast %cst_5 : f32 to vector<8x1xf32>
    %18 = arith.addf %14, %17 : vector<8x1xf32>
    %19 = math.rsqrt %18 : vector<8x1xf32>
    %20 = vector.broadcast %19 : vector<8x1xf32> to vector<8x128xf32>
    %21 = arith.mulf %16, %20 : vector<8x128xf32>
    %c0_6 = arith.constant 0 : index
    %c0_7 = arith.constant 0 : index
    %22 = vector.load %arg3[%c0_6, %c0_7] : memref<1x128xf32, #tpu.memory_space<vmem>>, vector<1x128xf32>
    %23 = vector.broadcast %22 : vector<1x128xf32> to vector<8x128xf32>
    %24 = arith.mulf %21, %23 : vector<8x128xf32>
    %c0_8 = arith.constant 0 : index
    %c0_9 = arith.constant 0 : index
    %25 = vector.load %arg4[%c0_8, %c0_9] : memref<1x128xf32, #tpu.memory_space<vmem>>, vector<1x128xf32>
    %26 = vector.broadcast %25 : vector<1x128xf32> to vector<8x128xf32>
    %27 = arith.addf %24, %26 : vector<8x128xf32>
    %28 = arith.truncf %27 : vector<8x128xf32> to vector<8x128xbf16>
    %c0_10 = arith.constant 0 : index
    %c0_11 = arith.constant 0 : index
    %29 = vector.load %arg5[%c0_10, %c0_11] : memref<128x128xbf16, #tpu.memory_space<vmem>>, vector<128x128xbf16>
    %cst_12 = arith.constant dense<0.000000e+00> : vector<8x128xf32>
    %30 = tpu.matmul %28, %29, %cst_12 {dimension_numbers = #tpu.dot_dimension_numbers<[1], [0], [0], [1], [0, 0, 1, 1], [], []>} : vector<8x128xbf16>, vector<128x128xbf16>, vector<8x128xf32> -> vector<8x128xf32>
    %c0_13 = arith.constant 0 : index
    %c0_14 = arith.constant 0 : index
    %31 = vector.load %arg6[%c0_13, %c0_14] : memref<1x128xf32, #tpu.memory_space<vmem>>, vector<1x128xf32>
    %32 = vector.broadcast %31 : vector<1x128xf32> to vector<8x128xf32>
    %33 = arith.addf %30, %32 : vector<8x128xf32>
    %cst_15 = arith.constant 5.000000e-01 : f32
    %34 = vector.broadcast %cst_15 : f32 to vector<8x128xf32>
    %35 = arith.mulf %34, %33 : vector<8x128xf32>
    %cst_16 = arith.constant 0.707106769 : f32
    %36 = vector.broadcast %cst_16 : f32 to vector<8x128xf32>
    %37 = arith.mulf %33, %36 : vector<8x128xf32>
    %38 = math.erf %37 : vector<8x128xf32>
    %cst_17 = arith.constant 1.000000e+00 : f32
    %39 = vector.broadcast %cst_17 : f32 to vector<8x128xf32>
    %40 = arith.addf %39, %38 : vector<8x128xf32>
    %41 = arith.mulf %35, %40 : vector<8x128xf32>
    %c0_18 = arith.constant 0 : index
    %c0_19 = arith.constant 0 : index
    %42 = vector.load %arg10[%c0_18, %c0_19] : memref<8x128xf32, #tpu.memory_space<vmem>>, vector<8x128xf32>
    %43 = arith.truncf %41 : vector<8x128xf32> to vector<8x128xbf16>
    %c0_20 = arith.constant 0 : index
    %c0_21 = arith.constant 0 : index
    %44 = vector.load %arg7[%c0_20, %c0_21] : memref<128x128xbf16, #tpu.memory_space<vmem>>, vector<128x128xbf16>
    %cst_22 = arith.constant dense<0.000000e+00> : vector<8x128xf32>
    %45 = tpu.matmul %43, %44, %cst_22 {dimension_numbers = #tpu.dot_dimension_numbers<[1], [0], [0], [1], [0, 0, 1, 1], [], []>} : vector<8x128xbf16>, vector<128x128xbf16>, vector<8x128xf32> -> vector<8x128xf32>
    %46 = arith.addf %42, %45 : vector<8x128xf32>
    %c0_23 = arith.constant 0 : index
    %c0_24 = arith.constant 0 : index
    %47 = vector.load %arg10[%c0_23, %c0_24] : memref<8x128xf32, #tpu.memory_space<vmem>>, vector<8x128xf32>
    tpu.vector_store %arg10[%c0_23, %c0_24], %46 {strides = array<i32>} : memref<8x128xf32, #tpu.memory_space<vmem>>, vector<8x128xf32>,
    %c0_i32_25 = arith.constant 0 : i32
    %48 = arith.cmpi eq, %arg1, %c0_i32_25 : i32
    %49 = arith.extui %48 : i1 to i32
    %c0_i32_26 = arith.constant 0 : i32
    %50 = arith.cmpi ne, %49, %c0_i32_26 : i32
    scf.if %50 {
      %c0_27 = arith.constant 0 : index
      %c0_28 = arith.constant 0 : index
      %51 = vector.load %arg10[%c0_27, %c0_28] : memref<8x128xf32, #tpu.memory_space<vmem>>, vector<8x128xf32>
      %c0_29 = arith.constant 0 : index
      %c0_30 = arith.constant 0 : index
      %52 = vector.load %arg8[%c0_29, %c0_30] : memref<1x128xf32, #tpu.memory_space<vmem>>, vector<1x128xf32>
      %53 = vector.broadcast %52 : vector<1x128xf32> to vector<8x128xf32>
      %54 = arith.addf %51, %53 : vector<8x128xf32>
      %55 = arith.truncf %54 : vector<8x128xf32> to vector<8x128xbf16>
      %c0_31 = arith.constant 0 : index
      %c0_32 = arith.constant 0 : index
      %56 = vector.load %arg9[%c0_31, %c0_32] : memref<8x128xbf16, #tpu.memory_space<vmem>>, vector<8x128xbf16>
      tpu.vector_store %arg9[%c0_31, %c0_32], %55 {strides = array<i32>} : memref<8x128xbf16, #tpu.memory_space<vmem>>, vector<8x128xbf16>,
    } else {
    }
    return
  }
  func.func @transform_0(%arg0: i32, %arg1: i32) -> (i32, i32) {
    %c0_i32 = arith.constant 0 : i32
    %c0_i32_0 = arith.constant 0 : i32
    return %arg0, %c0_i32 : i32, i32
  }
  func.func @transform_1(%arg0: i32, %arg1: i32) -> (i32, i32) {
    %c0_i32 = arith.constant 0 : i32
    %c0_i32_0 = arith.constant 0 : i32
    %c0_i32_1 = arith.constant 0 : i32
    return %c0_i32, %c0_i32_0 : i32, i32
  }
  func.func @transform_2(%arg0: i32, %arg1: i32) -> (i32, i32) {
    %c0_i32 = arith.constant 0 : i32
    %c0_i32_0 = arith.constant 0 : i32
    %c0_i32_1 = arith.constant 0 : i32
    return %c0_i32, %c0_i32_0 : i32, i32
  }
  func.func @transform_3(%arg0: i32, %arg1: i32) -> (i32, i32) {
    %c0_i32 = arith.constant 0 : i32
    %c0_i32_0 = arith.constant 0 : i32
    return %c0_i32, %arg1 : i32, i32
  }
  func.func @transform_4(%arg0: i32, %arg1: i32) -> (i32, i32) {
    %c0_i32 = arith.constant 0 : i32
    %c0_i32_0 = arith.constant 0 : i32
    return %c0_i32, %arg1 : i32, i32
  }
  func.func @transform_5(%arg0: i32, %arg1: i32) -> (i32, i32) {
    %c0_i32 = arith.constant 0 : i32
    %c0_i32_0 = arith.constant 0 : i32
    return %arg1, %c0_i32 : i32, i32
  }
  func.func @transform_6(%arg0: i32, %arg1: i32) -> (i32, i32) {
    %c0_i32 = arith.constant 0 : i32
    %c0_i32_0 = arith.constant 0 : i32
    %c0_i32_1 = arith.constant 0 : i32
    return %c0_i32, %c0_i32_0 : i32, i32
  }
  func.func @transform_7(%arg0: i32, %arg1: i32) -> (i32, i32) {
    %c0_i32 = arith.constant 0 : i32
    %c0_i32_0 = arith.constant 0 : i32
    return %arg0, %c0_i32 : i32, i32
  }
}

</mosaic_0001>

<llo_original>
// kernel: tpu_custom_call.1
$region0: #{tpu_custom_call.1}
  #allocation0 [shape = 'u32[]', space=smem, size = 0x4, offset = 0x4, fixed_abs, tag = 'smem constant byte address 0x4 - core index']
  #allocation1 [shape = 'u32[144,128]{1,0:T(1,128)}', space=vmem, size = 0x12000, scoped, tag = 'internal scratch']
  #allocation2 [shape = 'f32[8,128]{1,0:T(8,128)}', space=vmem, size = 0x1000, scoped, tag = 'scratch operand']
  %s0 = inlined_call_operand.hbm [shape: f32[8,128], index: 0, kind: input, shape index: {}]
  %s1 = inlined_call_operand.hbm [shape: f32[1,128], index: 1, kind: input, shape index: {}]
  %s2 = inlined_call_operand.hbm [shape: f32[1,128], index: 2, kind: input, shape index: {}]
  %s3 = inlined_call_operand.hbm [shape: bf16[128,128], index: 3, kind: input, shape index: {}]
  %s4 = inlined_call_operand.hbm [shape: f32[1,128], index: 4, kind: input, shape index: {}]
  %s5 = inlined_call_operand.hbm [shape: bf16[128,128], index: 5, kind: input, shape index: {}]
  %s6 = inlined_call_operand.hbm [shape: f32[1,128], index: 6, kind: input, shape index: {}]
  %s7 = inlined_call_operand.hbm [shape: bf16[8,128], index: 7, kind: output, shape index: {}]
  %s8 = sld [smem:[#allocation0]]
  $region74: #{tpu_custom_call.1} parent=0
    _
  %s10 = ssub.s32 1, %s8
  %s11 = scalar_select 0, %s10, %s8
  $region1: #{tpu_custom_call.1} parent=0
    #allocation3 [shape = 'u8[4096]{0}', space=vmem, size = 0x1000, scoped, tag = 'input window, operand 0, single buffered']
    #allocation4 [shape = 's32[1]{0}', space=sflag, size = 0x4, scoped, tag = 'scoped memory for tpu_custom_call.1']
    #allocation5 [shape = 's32[1]{0}', space=sflag, size = 0x4, scoped, tag = 'scoped memory for tpu_custom_call.1']
    #allocation6 [shape = 'u8[512]{0}', space=vmem, size = 0x400, scoped, tag = 'input window, operand 1, single buffered']
    #allocation7 [shape = 's32[1]{0}', space=sflag, size = 0x4, scoped, tag = 'scoped memory for tpu_custom_call.1']
    #allocation8 [shape = 'u8[512]{0}', space=vmem, size = 0x400, scoped, tag = 'input window, operand 2, single buffered']
    #allocation9 [shape = 'u8[32768]{0}', space=vmem, size = 0x8000, scoped, tag = 'input window, operand 3, single buffered']
    #allocation10 [shape = 's32[1]{0}', space=sflag, size = 0x4, scoped, tag = 'scoped memory for tpu_custom_call.1']
    #allocation11 [shape = 'u8[512]{0}', space=vmem, size = 0x400, scoped, tag = 'input window, operand 4, single buffered']
    #allocation12 [shape = 'u8[32768]{0}', space=vmem, size = 0x8000, scoped, tag = 'input window, operand 5, single buffered']
    #allocation13 [shape = 's32[1]{0}', space=sflag, size = 0x4, scoped, tag = 'scoped memory for tpu_custom_call.1']
    #allocation14 [shape = 'u8[512]{0}', space=vmem, size = 0x400, scoped, tag = 'input window, operand 6, single buffered']
    #allocation15 [shape = 'u8[2048]{0}', space=vmem, size = 0x800, scoped, tag = 'output window, operand 0, single buffered']
    %12 = vsyncpa [#allocation4], 0
    %13 = vsyncpa [#allocation7], 0
    %14 = vsyncpa [#allocation10], 0
    %15 = vsyncpa [#allocation13], 0
    %16 = vsyncpa [#allocation5], 0
    // Predicated region
    $region2: #{tpu_custom_call.1} parent=1 // pred_check
      _
    $region3: #{tpu_custom_call.1} parent=1 // pred_check_branch
      %18 = sbr.rel (0) target = $region5
    $region4: #{tpu_custom_call.1} parent=1 // pred_region
      %s20 = ssub.s32 128, 128
      %21 = vsyncadd [#allocation4], %s20
      %s23 = sshll.u32 [#allocation3], 4
      %s24 = int_to_ptr.vmem [resolvable:$true] %s23
      %26 = dma.hbm_to_vmem [thread:$0]  %s0, 128, %s24, [#allocation4]
    $region5: #{tpu_custom_call.1} parent=1 // pred_fallthru
      _
    // Predicated region
    $region6: #{tpu_custom_call.1} parent=1 // pred_check
      _
    $region7: #{tpu_custom_call.1} parent=1 // pred_check_branch
      %28 = sbr.rel (0) target = $region9
    $region8: #{tpu_custom_call.1} parent=1 // pred_region
      %s30 = ssub.s32 16, 16
      %31 = vsyncadd [#allocation7], %s30
      %s33 = sshll.u32 [#allocation6], 4
      %s34 = int_to_ptr.vmem [resolvable:$true] %s33
      %36 = dma.hbm_to_vmem [thread:$0]  %s1, 16, %s34, [#allocation7]
    $region9: #{tpu_custom_call.1} parent=1 // pred_fallthru
      _
    // Predicated region
    $region10: #{tpu_custom_call.1} parent=1 // pred_check
      _
    $region11: #{tpu_custom_call.1} parent=1 // pred_check_branch
      %38 = sbr.rel (0) target = $region13
    $region12: #{tpu_custom_call.1} parent=1 // pred_region
      %s40 = ssub.s32 16, 16
      %41 = vsyncadd [#allocation7], %s40
      %s43 = sshll.u32 [#allocation8], 4
      %s44 = int_to_ptr.vmem [resolvable:$true] %s43
      %46 = dma.hbm_to_vmem [thread:$0]  %s2, 16, %s44, [#allocation7]
    $region13: #{tpu_custom_call.1} parent=1 // pred_fallthru
      _
    // Predicated region
    $region14: #{tpu_custom_call.1} parent=1 // pred_check
      _
    $region15: #{tpu_custom_call.1} parent=1 // pred_check_branch
      %48 = sbr.rel (0) target = $region17
    $region16: #{tpu_custom_call.1} parent=1 // pred_region
      %s50 = ssub.s32 1024, 1024
      %51 = vsyncadd [#allocation10], %s50
      %s52 = sshll.u32 [#allocation9], 4
      %s53 = int_to_ptr.vmem [resolvable:$true] %s52
      %58 = dma.hbm_to_vmem [thread:$0]  %s3, 1024, %s53, [#allocation10], 64, 64, 4
    $region17: #{tpu_custom_call.1} parent=1 // pred_fallthru
      _
    // Predicated region
    $region18: #{tpu_custom_call.1} parent=1 // pred_check
      _
    $region19: #{tpu_custom_call.1} parent=1 // pred_check_branch
      %60 = sbr.rel (0) target = $region21
    $region20: #{tpu_custom_call.1} parent=1 // pred_region
      %s62 = ssub.s32 16, 16
      %63 = vsyncadd [#allocation10], %s62
      %s65 = sshll.u32 [#allocation11], 4
      %s66 = int_to_ptr.vmem [resolvable:$true] %s65
      %68 = dma.hbm_to_vmem [thread:$0]  %s4, 16, %s66, [#allocation10]
    $region21: #{tpu_custom_call.1} parent=1 // pred_fallthru
      _
    // Predicated region
    $region22: #{tpu_custom_call.1} parent=1 // pred_check
      _
    $region23: #{tpu_custom_call.1} parent=1 // pred_check_branch
      %70 = sbr.rel (0) target = $region25
    $region24: #{tpu_custom_call.1} parent=1 // pred_region
      %s72 = ssub.s32 1024, 1024
      %73 = vsyncadd [#allocation13], %s72
      %s74 = sshll.u32 [#allocation12], 4
      %s75 = int_to_ptr.vmem [resolvable:$true] %s74
      %80 = dma.hbm_to_vmem [thread:$0]  %s5, 1024, %s75, [#allocation13], 64, 64, 4
    $region25: #{tpu_custom_call.1} parent=1 // pred_fallthru
      _
    // Predicated region
    $region26: #{tpu_custom_call.1} parent=1 // pred_check
      _
    $region27: #{tpu_custom_call.1} parent=1 // pred_check_branch
      %82 = sbr.rel (0) target = $region29
    $region28: #{tpu_custom_call.1} parent=1 // pred_region
      %s84 = ssub.s32 16, 16
      %85 = vsyncadd [#allocation13], %s84
      %s87 = sshll.u32 [#allocation14], 4
      %s88 = int_to_ptr.vmem [resolvable:$true] %s87
      %90 = dma.hbm_to_vmem [thread:$0]  %s6, 16, %s88, [#allocation13]
    $region29: #{tpu_custom_call.1} parent=1 // pred_fallthru
      _
    // Predicated region
    $region30: #{tpu_custom_call.1} parent=1 // pred_check
      _
    $region31: #{tpu_custom_call.1} parent=1 // pred_check_branch
      %92 = sbr.rel (0) target = $region33
    $region32: #{tpu_custom_call.1} parent=1 // pred_region
      %93 = dma.done [#allocation4], 128
    $region33: #{tpu_custom_call.1} parent=1 // pred_fallthru
      _
    // Predicated region
    $region34: #{tpu_custom_call.1} parent=1 // pred_check
      _
    $region35: #{tpu_custom_call.1} parent=1 // pred_check_branch
      %95 = sbr.rel (0) target = $region37
    $region36: #{tpu_custom_call.1} parent=1 // pred_region
      %96 = dma.done [#allocation7], 16
    $region37: #{tpu_custom_call.1} parent=1 // pred_fallthru
      _
    // Predicated region
    $region38: #{tpu_custom_call.1} parent=1 // pred_check
      _
    $region39: #{tpu_custom_call.1} parent=1 // pred_check_branch
      %98 = sbr.rel (0) target = $region41
    $region40: #{tpu_custom_call.1} parent=1 // pred_region
      %99 = dma.done [#allocation7], 16
    $region41: #{tpu_custom_call.1} parent=1 // pred_fallthru
      _
    // Predicated region
    $region42: #{tpu_custom_call.1} parent=1 // pred_check
      _
    $region43: #{tpu_custom_call.1} parent=1 // pred_check_branch
      %101 = sbr.rel (0) target = $region45
    $region44: #{tpu_custom_call.1} parent=1 // pred_region
      %102 = dma.done [#allocation10], 1024
    $region45: #{tpu_custom_call.1} parent=1 // pred_fallthru
      _
    // Predicated region
    $region46: #{tpu_custom_call.1} parent=1 // pred_check
      _
    $region47: #{tpu_custom_call.1} parent=1 // pred_check_branch
      %104 = sbr.rel (0) target = $region49
    $region48: #{tpu_custom_call.1} parent=1 // pred_region
      %105 = dma.done [#allocation10], 16
    $region49: #{tpu_custom_call.1} parent=1 // pred_fallthru
      _
    // Predicated region
    $region50: #{tpu_custom_call.1} parent=1 // pred_check
      _
    $region51: #{tpu_custom_call.1} parent=1 // pred_check_branch
      %107 = sbr.rel (0) target = $region53
    $region52: #{tpu_custom_call.1} parent=1 // pred_region
      %108 = dma.done [#allocation13], 1024
    $region53: #{tpu_custom_call.1} parent=1 // pred_fallthru
      _
    // Predicated region
    $region54: #{tpu_custom_call.1} parent=1 // pred_check
      _
    $region55: #{tpu_custom_call.1} parent=1 // pred_check_branch
      %110 = sbr.rel (0) target = $region57
    $region56: #{tpu_custom_call.1} parent=1 // pred_region
      %111 = dma.done [#allocation13], 16
    $region57: #{tpu_custom_call.1} parent=1 // pred_fallthru
      _
    %p113 = scmp.eq.s32.totalorder 0, 0
    // Predicated region
    $region58: #{tpu_custom_call.1} parent=1 // pred_check
      %p114 = pneg %p113
    $region59: #{tpu_custom_call.1} parent=1 // pred_check_branch
      %116 = sbr.rel (%p114) target = $region61
    $region60: #{tpu_custom_call.1} parent=1 // pred_region
      %117 = vst [vmem:[#allocation2] sm:$0xff] 0.0
    $region61: #{tpu_custom_call.1} parent=1 // pred_fallthru
      _
    %v118 = vld [vmem:[#allocation3] sm:$0xff]
    %119 = vadd.xlane.f32.xlu0 %v118
    %v120 = vpop.xlane.xlu0 %119
    %v121 = vrcp.pop 128.0
    %v122 = vmul.f32 %v120, %v121
    %v123 = vsub.f32 %v118, %v122
    %v124 = vmul.f32 %v123, %v123
    %125 = vadd.xlane.f32.xlu0 %v124
    %v126 = vpop.xlane.xlu0 %125
    %v127 = vmul.f32 %v126, %v121
    %v128 = vadd.f32 %v127, 1e-05
    %v129 = vrsqrt.pop %v128
    %v130 = vmul.f32 %v123, %v129
    %v131 = vld [vmem:[#allocation6] sm:$0x1]
    %v133 = vlaneseq
    %v134 = vshrl.u32 %v133, 7
    %v135 = vsub.s32 0, %v134
    %v136 = vrot.slane %v131, %v135
    %v138 = vmul.f32 %v130, %v136
    %v139 = vld [vmem:[#allocation8] sm:$0x1]
    %v141 = vlaneseq
    %v142 = vshrl.u32 %v141, 7
    %v143 = vsub.s32 0, %v142
    %v144 = vrot.slane %v139, %v143
    %v146 = vadd.f32 %v138, %v144
    %v147 = vpack.c.bf16 %v146, %v146
    %v148 = vld [vmem:[#allocation9] sm:$0xf]
    %v149 = vld [vmem:[#allocation9 + $0x4] sm:$0xf]
    %v150 = vld [vmem:[#allocation9 + $0x8] sm:$0xf]
    %v151 = vld [vmem:[#allocation9 + $0xc] sm:$0xf]
    %v152 = vld [vmem:[#allocation9 + $0x10] sm:$0xf]
    %v153 = vld [vmem:[#allocation9 + $0x14] sm:$0xf]
    %v154 = vld [vmem:[#allocation9 + $0x18] sm:$0xf]
    %v155 = vld [vmem:[#allocation9 + $0x1c] sm:$0xf]
    %v156 = vld [vmem:[#allocation9 + $0x20] sm:$0xf]
    %v157 = vld [vmem:[#allocation9 + $0x24] sm:$0xf]
    %v158 = vld [vmem:[#allocation9 + $0x28] sm:$0xf]
    %v159 = vld [vmem:[#allocation9 + $0x2c] sm:$0xf]
    %v160 = vld [vmem:[#allocation9 + $0x30] sm:$0xf]
    %v161 = vld [vmem:[#allocation9 + $0x34] sm:$0xf]
    %v162 = vld [vmem:[#allocation9 + $0x38] sm:$0xf]
    %v163 = vld [vmem:[#allocation9 + $0x3c] sm:$0xf]
    %v164 = vld [vmem:[#allocation11] sm:$0x1]
    %v166 = vlaneseq
    %v167 = vshrl.u32 %v166, 7
    %v168 = vsub.s32 0, %v167
    %v169 = vrot.slane %v164, %v168
    %v187 = vunpack.c.l.b16 %v148
    %v188 = vunpack.c.l.b16 %v149
    %v189 = vunpack.c.l.b16 %v150
    %v190 = vunpack.c.l.b16 %v151
    %v191 = vunpack.c.l.b16 %v152
    %v192 = vunpack.c.l.b16 %v153
    %v193 = vunpack.c.l.b16 %v154
    %v194 = vunpack.c.l.b16 %v155
    %v195 = vunpack.c.l.b16 %v156
    %v196 = vunpack.c.l.b16 %v157
    %v197 = vunpack.c.l.b16 %v158
    %v198 = vunpack.c.l.b16 %v159
    %v199 = vunpack.c.l.b16 %v160
    %v200 = vunpack.c.l.b16 %v161
    %v201 = vunpack.c.l.b16 %v162
    %v202 = vunpack.c.l.b16 %v163
    %v203 = vpack.c.b16 %v188, %v187
    %v204 = vpack.c.b16 %v190, %v189
    %v205 = vpack.c.b16 %v192, %v191
    %v206 = vpack.c.b16 %v194, %v193
    %v207 = vpack.c.b16 %v196, %v195
    %v208 = vpack.c.b16 %v198, %v197
    %v209 = vpack.c.b16 %v200, %v199
    %v210 = vpack.c.b16 %v202, %v201
    %219 = vmatprep.subr.bf16.mxu0 0
    %220 = vmatpush1.bf16.msra.mxu0 %v203
    %221 = vmatprep.subr.bf16.mxu0 0
    %222 = vmatpush1.bf16.msra.mxu0 %v204
    %223 = vmatprep.subr.bf16.mxu0 0
    %224 = vmatpush1.bf16.msra.mxu0 %v205
    %225 = vmatprep.subr.bf16.mxu0 0
    %226 = vmatpush1.bf16.msra.mxu0 %v206
    %227 = vmatprep.subr.bf16.mxu0 0
    %228 = vmatpush1.bf16.msra.mxu0 %v207
    %229 = vmatprep.subr.bf16.mxu0 0
    %230 = vmatpush1.bf16.msra.mxu0 %v208
    %231 = vmatprep.subr.bf16.mxu0 0
    %232 = vmatpush1.bf16.msra.mxu0 %v209
    %233 = vmatprep.subr.bf16.mxu0 0
    %234 = vmatpush1.bf16.msra.mxu0 %v210
    %235 = vmatprep.subr.bf16.mxu0 0
    %236 = vmatpush1.bf16.msra.mxu0 0
    %237 = vmatprep.subr.bf16.mxu0 0
    %238 = vmatpush1.bf16.msra.mxu0 0
    %239 = vmatprep.subr.bf16.mxu0 0
    %240 = vmatpush1.bf16.msra.mxu0 0
    %241 = vmatprep.subr.bf16.mxu0 0
    %242 = vmatpush1.bf16.msra.mxu0 0
    %243 = vmatprep.subr.bf16.mxu0 0
    %244 = vmatpush1.bf16.msra.mxu0 0
    %245 = vmatprep.subr.bf16.mxu0 0
    %246 = vmatpush1.bf16.msra.mxu0 0
    %247 = vmatprep.subr.bf16.mxu0 0
    %248 = vmatpush1.bf16.msra.mxu0 0
    %249 = vmatprep.subr.bf16.mxu0 0
    %250 = vmatpush1.bf16.msra.mxu0 0
    %251 = vmatprep.mubr.bf16.mxu0 0
    %252 = vmatmul.mubr.bf16.gmra.mrb[0].mxu0 %v147
    %v253 = vpop.f32.mrb[0].mxu0
    %v254 = vadd.f32 %v169, %v253
    %v255 = vpop.f32.mrb[0].mxu0
    %v256 = vpop.f32.mrb[0].mxu0
    %v257 = vpop.f32.mrb[0].mxu0
    %258 = vdwg.mxu0
    %v259 = vmul.f32 %v254, 0.5
    %v260 = vmul.f32 %v254, 0.70710677
    %v261 = verf.f32.pop %v260
    %v262 = vadd.f32 %v261, 1.0
    %v263 = vmul.f32 %v259, %v262
    %v264 = vld [vmem:[#allocation2] sm:$0xff]
    %v265 = vpack.c.bf16 %v263, %v263
    %v266 = vld [vmem:[#allocation12] sm:$0xf]
    %v267 = vld [vmem:[#allocation12 + $0x4] sm:$0xf]
    %v268 = vld [vmem:[#allocation12 + $0x8] sm:$0xf]
    %v269 = vld [vmem:[#allocation12 + $0xc] sm:$0xf]
    %v270 = vld [vmem:[#allocation12 + $0x10] sm:$0xf]
    %v271 = vld [vmem:[#allocation12 + $0x14] sm:$0xf]
    %v272 = vld [vmem:[#allocation12 + $0x18] sm:$0xf]
    %v273 = vld [vmem:[#allocation12 + $0x1c] sm:$0xf]
    %v274 = vld [vmem:[#allocation12 + $0x20] sm:$0xf]
    %v275 = vld [vmem:[#allocation12 + $0x24] sm:$0xf]
    %v276 = vld [vmem:[#allocation12 + $0x28] sm:$0xf]
    %v277 = vld [vmem:[#allocation12 + $0x2c] sm:$0xf]
    %v278 = vld [vmem:[#allocation12 + $0x30] sm:$0xf]
    %v279 = vld [vmem:[#allocation12 + $0x34] sm:$0xf]
    %v280 = vld [vmem:[#allocation12 + $0x38] sm:$0xf]
    %v281 = vld [vmem:[#allocation12 + $0x3c] sm:$0xf]
    %v298 = vunpack.c.l.b16 %v266
    %v299 = vunpack.c.l.b16 %v267
    %v300 = vunpack.c.l.b16 %v268
    %v301 = vunpack.c.l.b16 %v269
    %v302 = vunpack.c.l.b16 %v270
    %v303 = vunpack.c.l.b16 %v271
    %v304 = vunpack.c.l.b16 %v272
    %v305 = vunpack.c.l.b16 %v273
    %v306 = vunpack.c.l.b16 %v274
    %v307 = vunpack.c.l.b16 %v275
    %v308 = vunpack.c.l.b16 %v276
    %v309 = vunpack.c.l.b16 %v277
    %v310 = vunpack.c.l.b16 %v278
    %v311 = vunpack.c.l.b16 %v279
    %v312 = vunpack.c.l.b16 %v280
    %v313 = vunpack.c.l.b16 %v281
    %v314 = vpack.c.b16 %v299, %v298
    %v315 = vpack.c.b16 %v301, %v300
    %v316 = vpack.c.b16 %v303, %v302
    %v317 = vpack.c.b16 %v305, %v304
    %v318 = vpack.c.b16 %v307, %v306
    %v319 = vpack.c.b16 %v309, %v308
    %v320 = vpack.c.b16 %v311, %v310
    %v321 = vpack.c.b16 %v313, %v312
    %330 = vmatprep.subr.bf16.mxu0 0
    %331 = vmatpush1.bf16.msra.mxu0 %v314
    %332 = vmatprep.subr.bf16.mxu0 0
    %333 = vmatpush1.bf16.msra.mxu0 %v315
    %334 = vmatprep.subr.bf16.mxu0 0
    %335 = vmatpush1.bf16.msra.mxu0 %v316
    %336 = vmatprep.subr.bf16.mxu0 0
    %337 = vmatpush1.bf16.msra.mxu0 %v317
    %338 = vmatprep.subr.bf16.mxu0 0
    %339 = vmatpush1.bf16.msra.mxu0 %v318
    %340 = vmatprep.subr.bf16.mxu0 0
    %341 = vmatpush1.bf16.msra.mxu0 %v319
    %342 = vmatprep.subr.bf16.mxu0 0
    %343 = vmatpush1.bf16.msra.mxu0 %v320
    %344 = vmatprep.subr.bf16.mxu0 0
    %345 = vmatpush1.bf16.msra.mxu0 %v321
    %346 = vmatprep.subr.bf16.mxu0 0
    %347 = vmatpush1.bf16.msra.mxu0 0
    %348 = vmatprep.subr.bf16.mxu0 0
    %349 = vmatpush1.bf16.msra.mxu0 0
    %350 = vmatprep.subr.bf16.mxu0 0
    %351 = vmatpush1.bf16.msra.mxu0 0
    %352 = vmatprep.subr.bf16.mxu0 0
    %353 = vmatpush1.bf16.msra.mxu0 0
    %354 = vmatprep.subr.bf16.mxu0 0
    %355 = vmatpush1.bf16.msra.mxu0 0
    %356 = vmatprep.subr.bf16.mxu0 0
    %357 = vmatpush1.bf16.msra.mxu0 0
    %358 = vmatprep.subr.bf16.mxu0 0
    %359 = vmatpush1.bf16.msra.mxu0 0
    %360 = vmatprep.subr.bf16.mxu0 0
    %361 = vmatpush1.bf16.msra.mxu0 0
    %362 = vmatprep.mubr.bf16.mxu0 0
    %363 = vmatmul.mubr.bf16.gmra.mrb[0].mxu0 %v265
    %v364 = vpop.f32.mrb[0].mxu0
    %v365 = vadd.f32 0.0, %v364
    %v366 = vpop.f32.mrb[0].mxu0
    %v367 = vpop.f32.mrb[0].mxu0
    %v368 = vpop.f32.mrb[0].mxu0
    %369 = vdwg.mxu0
    %v370 = vadd.f32 %v264, %v365
    %371 = vst [vmem:[#allocation2] sm:$0xff] %v370
    // Predicated region
    $region62: #{tpu_custom_call.1} parent=1 // pred_check
      %p372 = pneg %p113
    $region63: #{tpu_custom_call.1} parent=1 // pred_check_branch
      %374 = sbr.rel (%p372) target = $region65
    $region64: #{tpu_custom_call.1} parent=1 // pred_region
      %v375 = vld [vmem:[#allocation2] sm:$0xff]
      %v376 = vld [vmem:[#allocation14] sm:$0x1]
      %v378 = vlaneseq
      %v379 = vshrl.u32 %v378, 7
      %v380 = vsub.s32 0, %v379
      %v381 = vrot.slane %v376, %v380
      %v383 = vadd.f32 %v375, %v381
      %v384 = vpack.c.bf16 %v383, %v383
      %385 = vst [vmem:[#allocation15] sm:$0xf] %v384
    $region65: #{tpu_custom_call.1} parent=1 // pred_fallthru
      _
    // Predicated region
    $region66: #{tpu_custom_call.1} parent=1 // pred_check
      _
    $region67: #{tpu_custom_call.1} parent=1 // pred_check_branch
      %387 = sbr.rel (0) target = $region69
    $region68: #{tpu_custom_call.1} parent=1 // pred_region
      %s389 = ssub.s32 64, 64
      %390 = vsyncadd [#allocation5], %s389
      %s392 = sshll.u32 [#allocation15], 4
      %s393 = int_to_ptr.vmem [resolvable:$true] %s392
      %395 = dma.vmem_to_hbm [thread:$0]  %s393, 64, %s7, [#allocation5]
    $region69: #{tpu_custom_call.1} parent=1 // pred_fallthru
      _
    // Predicated region
    $region70: #{tpu_custom_call.1} parent=1 // pred_check
      _
    $region71: #{tpu_custom_call.1} parent=1 // pred_check_branch
      %397 = sbr.rel (0) target = $region73
    $region72: #{tpu_custom_call.1} parent=1 // pred_region
      %398 = dma.done [#allocation5], 64
    $region73: #{tpu_custom_call.1} parent=1 // pred_fallthru
      _
    %399 = vsyncpa [#allocation4], 1
    %400 = vsyncpa [#allocation7], 1
    %401 = vsyncpa [#allocation10], 1
    %402 = vsyncpa [#allocation13], 1
    %403 = vsyncpa [#allocation5], 1

</llo_original>
